<compile_context>
chip_gen: v7x
topology: tpu7x:2x2x1
jax: 0.10.0
libtpu: 0.0.40
codegen_flags: <defaults>
</compile_context>

<pallas_src>
import math
from functools import partial

import jax
import jax.numpy as jnp
from jax.experimental import pallas as pl
from jax.experimental.pallas import tpu as pltpu

LN_EPS = 1e-5


def _round_up(n, m):
    return ((n + m - 1) // m) * m


# ---------------------------------------------------------------------------
# Fused kernel: input linear -> N blocks -> final linear (feature-major)
# ---------------------------------------------------------------------------
def _utransformer_kernel(x_ref, pbt_ref, mat_ref, vec_ref, o_ref, *,
                         batch, seq_len, feat, hidden, num_layers):
    F, H, L = feat, hidden, seq_len

    def w(i, r, c):                       # bf16 (r, c) weight, (out, in) layout
        return mat_ref[i, 0:r, 0:c]

    def cvec(i, r):                       # f32 (r, 1) column vector
        return vec_ref[0:r, i:i + 1]

    def wdot(w_bf, act):                  # bf16 MXU matmul, f32 accumulation
        return jnp.dot(w_bf, act.astype(jnp.bfloat16),
                       preferred_element_type=jnp.float32)

    def layer_norm(t, gamma, beta):       # normalise over features (sublanes)
        mu = jnp.mean(t, axis=0, keepdims=True)
        var = jnp.mean(t * t, axis=0, keepdims=True) - mu * mu
        return (t - mu) * jax.lax.rsqrt(var + LN_EPS) * gamma + beta

    # Input Linear; activations are feature-major (F, B*L) = one dense vreg.
    x = wdot(w(0, F, F), x_ref[...]) + cvec(0, F)

    for n in range(num_layers):           # static unroll (num_layers is tiny)
        mi = 2 + 3 * n                    # weight-blob base index for layer n
        vi = 2 + 5 * n                    # vector-blob base index for layer n
        gamma = cvec(vi + 1, F)           # (F, 1) -> lane-broadcast for free
        beta = cvec(vi + 2, F)

        # SynthesizerRandom.  PyTorch quirk: `random_synthesizer(x)[0]` means
        # only batch 0's value projection contributes.  pbt_ref[n] holds
        # softmax(A)^T pre-tiled over batch (precomputed outside the kernel),
        # so one matmul yields the batch-broadcast (F, B*L) attention output.
        value0 = wdot(w(mi, F, F), x[:, 0:L]) + cvec(vi, F)          # (F, L)
        attn_b = jnp.dot(value0.astype(jnp.bfloat16), pbt_ref[n],
                         preferred_element_type=jnp.float32)          # (F, B*L)

        # dropout = identity (eval mode); shared LayerNorm affine per block.
        h = layer_norm(attn_b + x, gamma, beta)                       # (F, B*L)
        f = jnp.maximum(wdot(w(mi + 1, H, F), h) + cvec(vi + 3, H), 0.0)
        f = wdot(w(mi + 2, F, H), f) + cvec(vi + 4, F)
        x = layer_norm(f + h, gamma, beta)

    # Final Linear; (F, B*L) lane-dense unmasked store (single HBM writeback).
    o_ref[...] = wdot(w(1, F, F), x) + cvec(1, F)


# ---------------------------------------------------------------------------
# One-time parameter prep: softmax hoisted out of the kernel, weights
# transposed to (out, in), everything packed into 3 blobs (3 input DMAs).
# ---------------------------------------------------------------------------
def prepare_params(params, batch):
    F = params["lin_w"].shape[0]
    N, L, _ = params["attn"].shape
    H = params["w1"].shape[2]
    R = _round_up(max(F, H), 8)

    # 1) attention: row-softmax, transpose for the feature-major matmul and
    #    pre-tile over batch -> (N, L, B*L), bf16 MXU operand.
    p = jax.nn.softmax(params["attn"], axis=-1)                  # (N, L, L)
    p_bt = jnp.tile(jnp.swapaxes(p, 1, 2), (1, 1, batch))        # (N, L, B*L)

    # 2) all weight matrices in (out, in) orientation, zero-padded to (R, R)
    #    and stacked -> one bf16 blob.
    def pad_mat(m):
        return jnp.zeros((R, R), jnp.float32).at[:m.shape[0], :m.shape[1]].set(m)

    mats = [pad_mat(params["lin_w"].T), pad_mat(params["fin_w"].T)]
    for n in range(N):
        mats += [pad_mat(params["wv"][n].T),
                 pad_mat(params["w1"][n].T),
                 pad_mat(params["w2"][n].T)]
    mat_blob = jnp.stack(mats, axis=0).astype(jnp.bfloat16)      # (2+3N, R, R)

    # 3) all bias / LayerNorm-affine vectors packed as columns of one f32 blob
    #    (column vectors broadcast along lanes inside the kernel).
    def pad_vec(v):
        v = jnp.asarray(v).reshape(-1)
        return jnp.zeros((R,), jnp.float32).at[:v.shape[0]].set(v)

    vecs = [pad_vec(params["lin_b"]), pad_vec(params["fin_b"])]
    for n in range(N):
        vecs += [pad_vec(params["bv"][n]), pad_vec(params["gamma"][n]),
                 pad_vec(params["beta"][n]), pad_vec(params["b1"][n]),
                 pad_vec(params["b2"][n])]
    vec_blob = jnp.stack(vecs, axis=1)                           # (R, 2+5N)

    return dict(pbt=p_bt.astype(jnp.bfloat16), mats=mat_blob, vecs=vec_blob)


# ---------------------------------------------------------------------------
# Wrapper: single grid-less pallas_call, everything VMEM-resident.
# ---------------------------------------------------------------------------
def utransformer_forward(prepped, x, *, hidden):
    B, L, F = x.shape
    N = prepped["pbt"].shape[0]
    x_fm = x.reshape(B * L, F).T                 # feature-major (F, B*L)

    vmem = pl.BlockSpec(memory_space=pltpu.MemorySpace.VMEM)
    o_fm = pl.pallas_call(
        partial(_utransformer_kernel, batch=B, seq_len=L, feat=F,
                hidden=hidden, num_layers=N),
        out_shape=jax.ShapeDtypeStruct((F, B * L), jnp.float32),
        in_specs=[vmem] * 4,
        out_specs=vmem,
    )(x_fm, prepped["pbt"], prepped["mats"], prepped["vecs"])
    return o_fm.T.reshape(B, L, F)               # back to (B, L, F) in XLA


# ---------------------------------------------------------------------------
# Pure-JAX f32 reference (mirrors the PyTorch module exactly)
# ---------------------------------------------------------------------------
def reference_forward(params, x):
    hi = jax.lax.Precision.HIGHEST

    def ln(v, g, b):
        mu = jnp.mean(v, -1, keepdims=True)
        var = jnp.mean((v - mu) ** 2, -1, keepdims=True)
        return (v - mu) / jnp.sqrt(var + LN_EPS) * g + b

    y = jnp.einsum("blf,fo->blo", x, params["lin_w"], precision=hi) + params["lin_b"][0]
    for n in range(params["attn"].shape[0]):
        a = jax.nn.softmax(params["attn"][n], axis=-1)
        v0 = jnp.einsum("lf,fo->lo", y[0], params["wv"][n], precision=hi) + params["bv"][n][0]
        attn0 = jnp.einsum("lk,kf->lf", a, v0, precision=hi)
        g, b = params["gamma"][n][0], params["beta"][n][0]
        h = ln(attn0[None] + y, g, b)
        f = jnp.maximum(
            jnp.einsum("blf,fh->blh", h, params["w1"][n], precision=hi) + params["b1"][n][0], 0.0)
        f = jnp.einsum("blh,hf->blf", f, params["w2"][n], precision=hi) + params["b2"][n][0]
        y = ln(f + h, g, b)
    return jnp.einsum("blf,fo->blo", y, params["fin_w"], precision=hi) + params["fin_b"][0]


# ---------------------------------------------------------------------------
# Deterministic synthetic parameter init (shapes match the PyTorch module)
# ---------------------------------------------------------------------------
def _init_linear(key, fin, fout):
    kw, kb = jax.random.split(key)
    lim = 1.0 / math.sqrt(fin)
    w = jax.random.uniform(kw, (fin, fout), jnp.float32, -lim, lim)
    b = jax.random.uniform(kb, (1, fout), jnp.float32, -lim, lim)
    return w, b


def init_params(key, F, L, hdf, num_layers):
    H = F * hdf
    keys = jax.random.split(key, num_layers + 2)
    lin_w, lin_b = _init_linear(keys[0], F, F)
    fin_w, fin_b = _init_linear(keys[1], F, F)
    attn, wv, bv, w1, b1, w2, b2 = [], [], [], [], [], [], []
    for n in range(num_layers):
        k = jax.random.split(keys[2 + n], 3)
        lim = math.sqrt(6.0 / (L + L))               # xavier_uniform on (1, L, L)
        attn.append(jax.random.uniform(k[0], (L, L), jnp.float32, -lim, lim))
        w, b = _init_linear(k[1], F, F); wv.append(w); bv.append(b)
        ks = jax.random.split(k[2], 2)
        w, b = _init_linear(ks[0], F, H); w1.append(w); b1.append(b)
        w, b = _init_linear(ks[1], H, F); w2.append(w); b2.append(b)
    stack = lambda xs: jnp.stack(xs, axis=0)
    return dict(
        lin_w=lin_w, lin_b=lin_b, fin_w=fin_w, fin_b=fin_b,
        attn=stack(attn), wv=stack(wv), bv=stack(bv),
        gamma=jnp.ones((num_layers, 1, F), jnp.float32),
        beta=jnp.zeros((num_layers, 1, F), jnp.float32),
        w1=stack(w1), b1=stack(b1), w2=stack(w2), b2=stack(b2))


# ---------------------------------------------------------------------------
if __name__ == "__main__":
    NUM_FEATURES = 8        # num_features (in_dims)
    SENT_LEN = 64           # sentence_length
    HIDDEN_FACTOR = 2       # hidden_dim_factor
    NUM_LAYERS = 2          # num_layers
    BATCH = 2
    HIDDEN = NUM_FEATURES * HIDDEN_FACTOR

    key = jax.random.PRNGKey(0)
    kx, kp = jax.random.split(key)
    x = jax.random.normal(kx, (BATCH, SENT_LEN, NUM_FEATURES), dtype=jnp.float32)
    params = init_params(kp, NUM_FEATURES, SENT_LEN, HIDDEN_FACTOR, NUM_LAYERS)

    # One-time prep: softmax hoisted out of the kernel, weights packed into
    # 3 blobs (4 input DMAs total) and cast to bf16 for the MXU.
    prepped = prepare_params(params, BATCH)

    fwd = jax.jit(partial(utransformer_forward, hidden=HIDDEN))
    out = jax.block_until_ready(fwd(prepped, x))

    assert out.shape == (BATCH, SENT_LEN, NUM_FEATURES), out.shape
    assert bool(jnp.all(jnp.isfinite(out)))

    ref = reference_forward(params, x)
    max_err = float(jnp.max(jnp.abs(out - ref)))
    # bf16 MXU operands (f32 accumulation) vs. pure-f32 reference: expected
    # deviation is ~1e-2; structural/indexing bugs would produce O(1) errors.
    assert max_err < 4e-2, f"mismatch vs reference: {max_err}"

    print("KERNEL_OK")
</pallas_src>

<mosaic_0001>
module attributes {stable_mosaic.version = 11 : i64} {
  func.func @_utransformer_kernel(%arg0: memref<8x128xf32, #tpu.memory_space<vmem>>, %arg1: memref<2x64x128xbf16, #tpu.memory_space<vmem>>, %arg2: memref<8x16x16xbf16, #tpu.memory_space<vmem>>, %arg3: memref<16x12xf32, #tpu.memory_space<vmem>>, %arg4: memref<8x128xf32, #tpu.memory_space<vmem>>) attributes {dimension_semantics = [], scalar_prefetch = 0 : i64, scratch_operands = 0 : i64, tpu.core_type = #tpu.core_type<tc>} {
    %c0 = arith.constant 0 : index
    %c0_0 = arith.constant 0 : index
    %c0_1 = arith.constant 0 : index
    %0 = vector.load %arg2[%c0, %c0_0, %c0_1] : memref<8x16x16xbf16, #tpu.memory_space<vmem>>, vector<1x8x8xbf16>
    %1 = vector.shape_cast %0 : vector<1x8x8xbf16> to vector<8x8xbf16>
    %c0_2 = arith.constant 0 : index
    %c0_3 = arith.constant 0 : index
    %2 = vector.load %arg0[%c0_2, %c0_3] : memref<8x128xf32, #tpu.memory_space<vmem>>, vector<8x128xf32>
    %3 = arith.truncf %2 : vector<8x128xf32> to vector<8x128xbf16>
    %cst = arith.constant dense<0.000000e+00> : vector<8x128xf32>
    %4 = tpu.matmul %1, %3, %cst {dimension_numbers = #tpu.dot_dimension_numbers<[1], [0], [0], [1], [0, 0, 1, 1], [], []>} : vector<8x8xbf16>, vector<8x128xbf16>, vector<8x128xf32> -> vector<8x128xf32>
    %c0_4 = arith.constant 0 : index
    %c0_5 = arith.constant 0 : index
    %5 = vector.load %arg3[%c0_4, %c0_5] : memref<16x12xf32, #tpu.memory_space<vmem>>, vector<8x1xf32>
    %6 = vector.broadcast %5 : vector<8x1xf32> to vector<8x128xf32>
    %7 = arith.addf %4, %6 : vector<8x128xf32>
    %c0_6 = arith.constant 0 : index
    %c3 = arith.constant 3 : index
    %8 = vector.load %arg3[%c0_6, %c3] : memref<16x12xf32, #tpu.memory_space<vmem>>, vector<8x1xf32>
    %c0_7 = arith.constant 0 : index
    %c4 = arith.constant 4 : index
    %9 = vector.load %arg3[%c0_7, %c4] : memref<16x12xf32, #tpu.memory_space<vmem>>, vector<8x1xf32>
    %c2 = arith.constant 2 : index
    %c0_8 = arith.constant 0 : index
    %c0_9 = arith.constant 0 : index
    %10 = vector.load %arg2[%c2, %c0_8, %c0_9] : memref<8x16x16xbf16, #tpu.memory_space<vmem>>, vector<1x8x8xbf16>
    %11 = vector.shape_cast %10 : vector<1x8x8xbf16> to vector<8x8xbf16>
    %12 = vector.extract_strided_slice %7 {offsets = [0, 0], sizes = [8, 64], strides = [1, 1]} : vector<8x128xf32> to vector<8x64xf32>
    %13 = arith.truncf %12 : vector<8x64xf32> to vector<8x64xbf16>
    %cst_10 = arith.constant dense<0.000000e+00> : vector<8x64xf32>
    %14 = tpu.matmul %11, %13, %cst_10 {dimension_numbers = #tpu.dot_dimension_numbers<[1], [0], [0], [1], [0, 0, 1, 1], [], []>} : vector<8x8xbf16>, vector<8x64xbf16>, vector<8x64xf32> -> vector<8x64xf32>
    %c0_11 = arith.constant 0 : index
    %c2_12 = arith.constant 2 : index
    %15 = vector.load %arg3[%c0_11, %c2_12] : memref<16x12xf32, #tpu.memory_space<vmem>>, vector<8x1xf32>
    %16 = vector.broadcast %15 : vector<8x1xf32> to vector<8x64xf32>
    %17 = arith.addf %14, %16 : vector<8x64xf32>
    %18 = arith.truncf %17 : vector<8x64xf32> to vector<8x64xbf16>
    %c0_13 = arith.constant 0 : index
    %c0_14 = arith.constant 0 : index
    %c0_15 = arith.constant 0 : index
    %19 = vector.load %arg1[%c0_13, %c0_14, %c0_15] : memref<2x64x128xbf16, #tpu.memory_space<vmem>>, vector<1x64x128xbf16>
    %20 = vector.shape_cast %19 : vector<1x64x128xbf16> to vector<64x128xbf16>
    %cst_16 = arith.constant dense<0.000000e+00> : vector<8x128xf32>
    %21 = tpu.matmul %18, %20, %cst_16 {dimension_numbers = #tpu.dot_dimension_numbers<[1], [0], [0], [1], [0, 0, 1, 1], [], []>} : vector<8x64xbf16>, vector<64x128xbf16>, vector<8x128xf32> -> vector<8x128xf32>
    %22 = arith.addf %21, %7 : vector<8x128xf32>
    %cst_17 = arith.constant dense<0.000000e+00> : vector<128xf32>
    %23 = vector.multi_reduction <add>, %22, %cst_17 [0] : vector<8x128xf32> to vector<128xf32>
    %24 = vector.shape_cast %23 : vector<128xf32> to vector<1x128xf32>
    %cst_18 = arith.constant 8.000000e+00 : f32
    %25 = vector.broadcast %cst_18 : f32 to vector<1x128xf32>
    %26 = arith.divf %24, %25 : vector<1x128xf32>
    %27 = arith.mulf %22, %22 : vector<8x128xf32>
    %cst_19 = arith.constant dense<0.000000e+00> : vector<128xf32>
    %28 = vector.multi_reduction <add>, %27, %cst_19 [0] : vector<8x128xf32> to vector<128xf32>
    %29 = vector.shape_cast %28 : vector<128xf32> to vector<1x128xf32>
    %cst_20 = arith.constant 8.000000e+00 : f32
    %30 = vector.broadcast %cst_20 : f32 to vector<1x128xf32>
    %31 = arith.divf %29, %30 : vector<1x128xf32>
    %32 = arith.mulf %26, %26 : vector<1x128xf32>
    %33 = arith.subf %31, %32 : vector<1x128xf32>
    %34 = vector.broadcast %26 : vector<1x128xf32> to vector<8x128xf32>
    %35 = arith.subf %22, %34 : vector<8x128xf32>
    %cst_21 = arith.constant 9.99999974E-6 : f32
    %36 = vector.broadcast %cst_21 : f32 to vector<1x128xf32>
    %37 = arith.addf %33, %36 : vector<1x128xf32>
    %38 = math.rsqrt %37 : vector<1x128xf32>
    %39 = vector.broadcast %38 : vector<1x128xf32> to vector<8x128xf32>
    %40 = arith.mulf %35, %39 : vector<8x128xf32>
    %41 = vector.broadcast %8 : vector<8x1xf32> to vector<8x128xf32>
    %42 = arith.mulf %40, %41 : vector<8x128xf32>
    %43 = vector.broadcast %9 : vector<8x1xf32> to vector<8x128xf32>
    %44 = arith.addf %42, %43 : vector<8x128xf32>
    %c3_22 = arith.constant 3 : index
    %c0_23 = arith.constant 0 : index
    %c0_24 = arith.constant 0 : index
    %45 = vector.load %arg2[%c3_22, %c0_23, %c0_24] : memref<8x16x16xbf16, #tpu.memory_space<vmem>>, vector<1x16x8xbf16>
    %46 = vector.shape_cast %45 : vector<1x16x8xbf16> to vector<16x8xbf16>
    %47 = arith.truncf %44 : vector<8x128xf32> to vector<8x128xbf16>
    %cst_25 = arith.constant dense<0.000000e+00> : vector<16x128xf32>
    %48 = tpu.matmul %46, %47, %cst_25 {dimension_numbers = #tpu.dot_dimension_numbers<[1], [0], [0], [1], [0, 0, 1, 1], [], []>} : vector<16x8xbf16>, vector<8x128xbf16>, vector<16x128xf32> -> vector<16x128xf32>
    %c0_26 = arith.constant 0 : index
    %c5 = arith.constant 5 : index
    %49 = vector.load %arg3[%c0_26, %c5] : memref<16x12xf32, #tpu.memory_space<vmem>>, vector<16x1xf32>
    %50 = vector.broadcast %49 : vector<16x1xf32> to vector<16x128xf32>
    %51 = arith.addf %48, %50 : vector<16x128xf32>
    %cst_27 = arith.constant 0.000000e+00 : f32
    %52 = vector.broadcast %cst_27 : f32 to vector<16x128xf32>
    %53 = arith.maximumf %51, %52 : vector<16x128xf32>
    %c4_28 = arith.constant 4 : index
    %c0_29 = arith.constant 0 : index
    %c0_30 = arith.constant 0 : index
    %54 = vector.load %arg2[%c4_28, %c0_29, %c0_30] : memref<8x16x16xbf16, #tpu.memory_space<vmem>>, vector<1x8x16xbf16>
    %55 = vector.shape_cast %54 : vector<1x8x16xbf16> to vector<8x16xbf16>
    %56 = arith.truncf %53 : vector<16x128xf32> to vector<16x128xbf16>
    %cst_31 = arith.constant dense<0.000000e+00> : vector<8x128xf32>
    %57 = tpu.matmul %55, %56, %cst_31 {dimension_numbers = #tpu.dot_dimension_numbers<[1], [0], [0], [1], [0, 0, 1, 1], [], []>} : vector<8x16xbf16>, vector<16x128xbf16>, vector<8x128xf32> -> vector<8x128xf32>
    %c0_32 = arith.constant 0 : index
    %c6 = arith.constant 6 : index
    %58 = vector.load %arg3[%c0_32, %c6] : memref<16x12xf32, #tpu.memory_space<vmem>>, vector<8x1xf32>
    %59 = vector.broadcast %58 : vector<8x1xf32> to vector<8x128xf32>
    %60 = arith.addf %57, %59 : vector<8x128xf32>
    %61 = arith.addf %60, %44 : vector<8x128xf32>
    %cst_33 = arith.constant dense<0.000000e+00> : vector<128xf32>
    %62 = vector.multi_reduction <add>, %61, %cst_33 [0] : vector<8x128xf32> to vector<128xf32>
    %63 = vector.shape_cast %62 : vector<128xf32> to vector<1x128xf32>
    %cst_34 = arith.constant 8.000000e+00 : f32
    %64 = vector.broadcast %cst_34 : f32 to vector<1x128xf32>
    %65 = arith.divf %63, %64 : vector<1x128xf32>
    %66 = arith.mulf %61, %61 : vector<8x128xf32>
    %cst_35 = arith.constant dense<0.000000e+00> : vector<128xf32>
    %67 = vector.multi_reduction <add>, %66, %cst_35 [0] : vector<8x128xf32> to vector<128xf32>
    %68 = vector.shape_cast %67 : vector<128xf32> to vector<1x128xf32>
    %cst_36 = arith.constant 8.000000e+00 : f32
    %69 = vector.broadcast %cst_36 : f32 to vector<1x128xf32>
    %70 = arith.divf %68, %69 : vector<1x128xf32>
    %71 = arith.mulf %65, %65 : vector<1x128xf32>
    %72 = arith.subf %70, %71 : vector<1x128xf32>
    %73 = vector.broadcast %65 : vector<1x128xf32> to vector<8x128xf32>
    %74 = arith.subf %61, %73 : vector<8x128xf32>
    %cst_37 = arith.constant 9.99999974E-6 : f32
    %75 = vector.broadcast %cst_37 : f32 to vector<1x128xf32>
    %76 = arith.addf %72, %75 : vector<1x128xf32>
    %77 = math.rsqrt %76 : vector<1x128xf32>
    %78 = vector.broadcast %77 : vector<1x128xf32> to vector<8x128xf32>
    %79 = arith.mulf %74, %78 : vector<8x128xf32>
    %80 = vector.broadcast %8 : vector<8x1xf32> to vector<8x128xf32>
    %81 = arith.mulf %79, %80 : vector<8x128xf32>
    %82 = vector.broadcast %9 : vector<8x1xf32> to vector<8x128xf32>
    %83 = arith.addf %81, %82 : vector<8x128xf32>
    %c0_38 = arith.constant 0 : index
    %c8 = arith.constant 8 : index
    %84 = vector.load %arg3[%c0_38, %c8] : memref<16x12xf32, #tpu.memory_space<vmem>>, vector<8x1xf32>
    %c0_39 = arith.constant 0 : index
    %c9 = arith.constant 9 : index
    %85 = vector.load %arg3[%c0_39, %c9] : memref<16x12xf32, #tpu.memory_space<vmem>>, vector<8x1xf32>
    %c5_40 = arith.constant 5 : index
    %c0_41 = arith.constant 0 : index
    %c0_42 = arith.constant 0 : index
    %86 = vector.load %arg2[%c5_40, %c0_41, %c0_42] : memref<8x16x16xbf16, #tpu.memory_space<vmem>>, vector<1x8x8xbf16>
    %87 = vector.shape_cast %86 : vector<1x8x8xbf16> to vector<8x8xbf16>
    %88 = vector.extract_strided_slice %83 {offsets = [0, 0], sizes = [8, 64], strides = [1, 1]} : vector<8x128xf32> to vector<8x64xf32>
    %89 = arith.truncf %88 : vector<8x64xf32> to vector<8x64xbf16>
    %cst_43 = arith.constant dense<0.000000e+00> : vector<8x64xf32>
    %90 = tpu.matmul %87, %89, %cst_43 {dimension_numbers = #tpu.dot_dimension_numbers<[1], [0], [0], [1], [0, 0, 1, 1], [], []>} : vector<8x8xbf16>, vector<8x64xbf16>, vector<8x64xf32> -> vector<8x64xf32>
    %c0_44 = arith.constant 0 : index
    %c7 = arith.constant 7 : index
    %91 = vector.load %arg3[%c0_44, %c7] : memref<16x12xf32, #tpu.memory_space<vmem>>, vector<8x1xf32>
    %92 = vector.broadcast %91 : vector<8x1xf32> to vector<8x64xf32>
    %93 = arith.addf %90, %92 : vector<8x64xf32>
    %94 = arith.truncf %93 : vector<8x64xf32> to vector<8x64xbf16>
    %c1 = arith.constant 1 : index
    %c0_45 = arith.constant 0 : index
    %c0_46 = arith.constant 0 : index
    %95 = vector.load %arg1[%c1, %c0_45, %c0_46] : memref<2x64x128xbf16, #tpu.memory_space<vmem>>, vector<1x64x128xbf16>
    %96 = vector.shape_cast %95 : vector<1x64x128xbf16> to vector<64x128xbf16>
    %cst_47 = arith.constant dense<0.000000e+00> : vector<8x128xf32>
    %97 = tpu.matmul %94, %96, %cst_47 {dimension_numbers = #tpu.dot_dimension_numbers<[1], [0], [0], [1], [0, 0, 1, 1], [], []>} : vector<8x64xbf16>, vector<64x128xbf16>, vector<8x128xf32> -> vector<8x128xf32>
    %98 = arith.addf %97, %83 : vector<8x128xf32>
    %cst_48 = arith.constant dense<0.000000e+00> : vector<128xf32>
    %99 = vector.multi_reduction <add>, %98, %cst_48 [0] : vector<8x128xf32> to vector<128xf32>
    %100 = vector.shape_cast %99 : vector<128xf32> to vector<1x128xf32>
    %cst_49 = arith.constant 8.000000e+00 : f32
    %101 = vector.broadcast %cst_49 : f32 to vector<1x128xf32>
    %102 = arith.divf %100, %101 : vector<1x128xf32>
    %103 = arith.mulf %98, %98 : vector<8x128xf32>
    %cst_50 = arith.constant dense<0.000000e+00> : vector<128xf32>
    %104 = vector.multi_reduction <add>, %103, %cst_50 [0] : vector<8x128xf32> to vector<128xf32>
    %105 = vector.shape_cast %104 : vector<128xf32> to vector<1x128xf32>
    %cst_51 = arith.constant 8.000000e+00 : f32
    %106 = vector.broadcast %cst_51 : f32 to vector<1x128xf32>
    %107 = arith.divf %105, %106 : vector<1x128xf32>
    %108 = arith.mulf %102, %102 : vector<1x128xf32>
    %109 = arith.subf %107, %108 : vector<1x128xf32>
    %110 = vector.broadcast %102 : vector<1x128xf32> to vector<8x128xf32>
    %111 = arith.subf %98, %110 : vector<8x128xf32>
    %cst_52 = arith.constant 9.99999974E-6 : f32
    %112 = vector.broadcast %cst_52 : f32 to vector<1x128xf32>
    %113 = arith.addf %109, %112 : vector<1x128xf32>
    %114 = math.rsqrt %113 : vector<1x128xf32>
    %115 = vector.broadcast %114 : vector<1x128xf32> to vector<8x128xf32>
    %116 = arith.mulf %111, %115 : vector<8x128xf32>
    %117 = vector.broadcast %84 : vector<8x1xf32> to vector<8x128xf32>
    %118 = arith.mulf %116, %117 : vector<8x128xf32>
    %119 = vector.broadcast %85 : vector<8x1xf32> to vector<8x128xf32>
    %120 = arith.addf %118, %119 : vector<8x128xf32>
    %c6_53 = arith.constant 6 : index
    %c0_54 = arith.constant 0 : index
    %c0_55 = arith.constant 0 : index
    %121 = vector.load %arg2[%c6_53, %c0_54, %c0_55] : memref<8x16x16xbf16, #tpu.memory_space<vmem>>, vector<1x16x8xbf16>
    %122 = vector.shape_cast %121 : vector<1x16x8xbf16> to vector<16x8xbf16>
    %123 = arith.truncf %120 : vector<8x128xf32> to vector<8x128xbf16>
    %cst_56 = arith.constant dense<0.000000e+00> : vector<16x128xf32>
    %124 = tpu.matmul %122, %123, %cst_56 {dimension_numbers = #tpu.dot_dimension_numbers<[1], [0], [0], [1], [0, 0, 1, 1], [], []>} : vector<16x8xbf16>, vector<8x128xbf16>, vector<16x128xf32> -> vector<16x128xf32>
    %c0_57 = arith.constant 0 : index
    %c10 = arith.constant 10 : index
    %125 = vector.load %arg3[%c0_57, %c10] : memref<16x12xf32, #tpu.memory_space<vmem>>, vector<16x1xf32>
    %126 = vector.broadcast %125 : vector<16x1xf32> to vector<16x128xf32>
    %127 = arith.addf %124, %126 : vector<16x128xf32>
    %cst_58 = arith.constant 0.000000e+00 : f32
    %128 = vector.broadcast %cst_58 : f32 to vector<16x128xf32>
    %129 = arith.maximumf %127, %128 : vector<16x128xf32>
    %c7_59 = arith.constant 7 : index
    %c0_60 = arith.constant 0 : index
    %c0_61 = arith.constant 0 : index
    %130 = vector.load %arg2[%c7_59, %c0_60, %c0_61] : memref<8x16x16xbf16, #tpu.memory_space<vmem>>, vector<1x8x16xbf16>
    %131 = vector.shape_cast %130 : vector<1x8x16xbf16> to vector<8x16xbf16>
    %132 = arith.truncf %129 : vector<16x128xf32> to vector<16x128xbf16>
    %cst_62 = arith.constant dense<0.000000e+00> : vector<8x128xf32>
    %133 = tpu.matmul %131, %132, %cst_62 {dimension_numbers = #tpu.dot_dimension_numbers<[1], [0], [0], [1], [0, 0, 1, 1], [], []>} : vector<8x16xbf16>, vector<16x128xbf16>, vector<8x128xf32> -> vector<8x128xf32>
    %c0_63 = arith.constant 0 : index
    %c11 = arith.constant 11 : index
    %134 = vector.load %arg3[%c0_63, %c11] : memref<16x12xf32, #tpu.memory_space<vmem>>, vector<8x1xf32>
    %135 = vector.broadcast %134 : vector<8x1xf32> to vector<8x128xf32>
    %136 = arith.addf %133, %135 : vector<8x128xf32>
    %137 = arith.addf %136, %120 : vector<8x128xf32>
    %cst_64 = arith.constant dense<0.000000e+00> : vector<128xf32>
    %138 = vector.multi_reduction <add>, %137, %cst_64 [0] : vector<8x128xf32> to vector<128xf32>
    %139 = vector.shape_cast %138 : vector<128xf32> to vector<1x128xf32>
    %cst_65 = arith.constant 8.000000e+00 : f32
    %140 = vector.broadcast %cst_65 : f32 to vector<1x128xf32>
    %141 = arith.divf %139, %140 : vector<1x128xf32>
    %142 = arith.mulf %137, %137 : vector<8x128xf32>
    %cst_66 = arith.constant dense<0.000000e+00> : vector<128xf32>
    %143 = vector.multi_reduction <add>, %142, %cst_66 [0] : vector<8x128xf32> to vector<128xf32>
    %144 = vector.shape_cast %143 : vector<128xf32> to vector<1x128xf32>
    %cst_67 = arith.constant 8.000000e+00 : f32
    %145 = vector.broadcast %cst_67 : f32 to vector<1x128xf32>
    %146 = arith.divf %144, %145 : vector<1x128xf32>
    %147 = arith.mulf %141, %141 : vector<1x128xf32>
    %148 = arith.subf %146, %147 : vector<1x128xf32>
    %149 = vector.broadcast %141 : vector<1x128xf32> to vector<8x128xf32>
    %150 = arith.subf %137, %149 : vector<8x128xf32>
    %cst_68 = arith.constant 9.99999974E-6 : f32
    %151 = vector.broadcast %cst_68 : f32 to vector<1x128xf32>
    %152 = arith.addf %148, %151 : vector<1x128xf32>
    %153 = math.rsqrt %152 : vector<1x128xf32>
    %154 = vector.broadcast %153 : vector<1x128xf32> to vector<8x128xf32>
    %155 = arith.mulf %150, %154 : vector<8x128xf32>
    %156 = vector.broadcast %84 : vector<8x1xf32> to vector<8x128xf32>
    %157 = arith.mulf %155, %156 : vector<8x128xf32>
    %158 = vector.broadcast %85 : vector<8x1xf32> to vector<8x128xf32>
    %159 = arith.addf %157, %158 : vector<8x128xf32>
    %c1_69 = arith.constant 1 : index
    %c0_70 = arith.constant 0 : index
    %c0_71 = arith.constant 0 : index
    %160 = vector.load %arg2[%c1_69, %c0_70, %c0_71] : memref<8x16x16xbf16, #tpu.memory_space<vmem>>, vector<1x8x8xbf16>
    %161 = vector.shape_cast %160 : vector<1x8x8xbf16> to vector<8x8xbf16>
    %162 = arith.truncf %159 : vector<8x128xf32> to vector<8x128xbf16>
    %cst_72 = arith.constant dense<0.000000e+00> : vector<8x128xf32>
    %163 = tpu.matmul %161, %162, %cst_72 {dimension_numbers = #tpu.dot_dimension_numbers<[1], [0], [0], [1], [0, 0, 1, 1], [], []>} : vector<8x8xbf16>, vector<8x128xbf16>, vector<8x128xf32> -> vector<8x128xf32>
    %c0_73 = arith.constant 0 : index
    %c1_74 = arith.constant 1 : index
    %164 = vector.load %arg3[%c0_73, %c1_74] : memref<16x12xf32, #tpu.memory_space<vmem>>, vector<8x1xf32>
    %165 = vector.broadcast %164 : vector<8x1xf32> to vector<8x128xf32>
    %166 = arith.addf %163, %165 : vector<8x128xf32>
    %c0_75 = arith.constant 0 : index
    %c0_76 = arith.constant 0 : index
    %167 = vector.load %arg4[%c0_75, %c0_76] : memref<8x128xf32, #tpu.memory_space<vmem>>, vector<8x128xf32>
    tpu.vector_store %arg4[%c0_75, %c0_76], %166 {strides = array<i32>} : memref<8x128xf32, #tpu.memory_space<vmem>>, vector<8x128xf32>,
    return
  }
}

</mosaic_0001>

<llo_original>
// kernel: utransformer_forward.1
$region0: #{utransformer_forward.1}
  #allocation0 [shape = 'u32[]', space=smem, size = 0x4, offset = 0x4, fixed_abs, tag = 'smem constant byte address 0x4 - core index']
  #allocation1 [shape = 'u32[144,128]{1,0:T(1,128)}', space=vmem, size = 0x12000, scoped, tag = 'internal scratch']
  %s0 = inlined_call_operand.vmem [shape: f32[8,128], index: 0, kind: input, shape index: {}]
  %s1 = inlined_call_operand.hbm [shape: bf16[2,64,128], index: 1, kind: input, shape index: {}]
  %s2 = inlined_call_operand.hbm [shape: bf16[8,16,16], index: 2, kind: input, shape index: {}]
  %s3 = inlined_call_operand.vmem [shape: f32[16,12], index: 3, kind: input, shape index: {}]
  %s4 = inlined_call_operand.vmem [shape: f32[8,128], index: 4, kind: output, shape index: {}]
  %s5 = sld [smem:[#allocation0]]
  $region34: #{utransformer_forward.1} parent=0
    _
  %s7 = ssub.s32 1, %s5
  %s8 = scalar_select 0, %s7, %s5
  $region1: #{utransformer_forward.1} parent=0
    #allocation2 [shape = 'u8[32768]{0}', space=vmem, size = 0x8000, scoped, tag = 'input window, operand 1, single buffered']
    #allocation3 [shape = 's32[1]{0}', space=sflag, size = 0x4, scoped, tag = 'scoped memory for utransformer_forward.1']
    #allocation4 [shape = 'u8[32768]{0}', space=vmem, size = 0x8000, scoped, tag = 'input window, operand 2, single buffered']
    #allocation5 [shape = 's32[1]{0}', space=sflag, size = 0x4, scoped, tag = 'scoped memory for utransformer_forward.1']
    %9 = vsyncpa [#allocation3], 0
    %10 = vsyncpa [#allocation5], 0
    // Predicated region
    $region2: #{utransformer_forward.1} parent=1 // pred_check
      _
    $region3: #{utransformer_forward.1} parent=1 // pred_check_branch
      %12 = sbr.rel (0) target = $region5
    $region4: #{utransformer_forward.1} parent=1 // pred_region
      _
    $region5: #{utransformer_forward.1} parent=1 // pred_fallthru
      _
    // Predicated region
    $region6: #{utransformer_forward.1} parent=1 // pred_check
      _
    $region7: #{utransformer_forward.1} parent=1 // pred_check_branch
      %14 = sbr.rel (0) target = $region9
    $region8: #{utransformer_forward.1} parent=1 // pred_region
      %s16 = ssub.s32 1024, 1024
      %17 = vsyncadd [#allocation3], %s16
      %s18 = sshll.u32 [#allocation2], 4
      %s19 = int_to_ptr.vmem [resolvable:$true] %s18
      %24 = dma.hbm_to_vmem [thread:$0]  %s1, 1024, %s19, [#allocation3], 64, 64, 4
    $region9: #{utransformer_forward.1} parent=1 // pred_fallthru
      _
    // Predicated region
    $region10: #{utransformer_forward.1} parent=1 // pred_check
      _
    $region11: #{utransformer_forward.1} parent=1 // pred_check_branch
      %26 = sbr.rel (0) target = $region13
    $region12: #{utransformer_forward.1} parent=1 // pred_region
      %s28 = ssub.s32 1024, 1024
      %29 = vsyncadd [#allocation5], %s28
      %s30 = sshll.u32 [#allocation4], 4
      %s31 = int_to_ptr.vmem [resolvable:$true] %s30
      %36 = dma.hbm_to_vmem [thread:$0]  %s2, 1024, %s31, [#allocation5], 64, 64, 4
    $region13: #{utransformer_forward.1} parent=1 // pred_fallthru
      _
    // Predicated region
    $region14: #{utransformer_forward.1} parent=1 // pred_check
      _
    $region15: #{utransformer_forward.1} parent=1 // pred_check_branch
      %38 = sbr.rel (0) target = $region17
    $region16: #{utransformer_forward.1} parent=1 // pred_region
      _
    $region17: #{utransformer_forward.1} parent=1 // pred_fallthru
      _
    // Predicated region
    $region18: #{utransformer_forward.1} parent=1 // pred_check
      _
    $region19: #{utransformer_forward.1} parent=1 // pred_check_branch
      %40 = sbr.rel (0) target = $region21
    $region20: #{utransformer_forward.1} parent=1 // pred_region
      %41 = dma.done [#allocation3], 1024
    $region21: #{utransformer_forward.1} parent=1 // pred_fallthru
      _
    // Predicated region
    $region22: #{utransformer_forward.1} parent=1 // pred_check
      _
    $region23: #{utransformer_forward.1} parent=1 // pred_check_branch
      %43 = sbr.rel (0) target = $region25
    $region24: #{utransformer_forward.1} parent=1 // pred_region
      %44 = dma.done [#allocation5], 1024
    $region25: #{utransformer_forward.1} parent=1 // pred_fallthru
      _
    %v46 = vld [vmem:[#allocation4] sm:$0xf]
    %v47 = vld [vmem:[%s0] sm:$0xff]
    %v48 = vpack.c.bf16 %v47, %v47
    %v49 = vld [vmem:[%s3] sm:$0xff]
    %51 = vset.pattern.permute.xlu0 0
    %52 = vperm.xlu0 %51, %v49
    %v53 = vpop.permute.xlu0 %52
    %vm55 = vcmask 64512
    %v57 = vsel %vm55, %v46, 0
    %vm59 = vcmask 1043456
    %v61 = vsel %vm59, %v48, 0
    %63 = vmatprep.subr.bf16.mxu0 0
    %64 = vmatpush1.bf16.msra.mxu0 %v61
    %65 = vmatprep.subr.bf16.mxu0 0
    %66 = vmatpush1.bf16.msra.mxu0 0
    %67 = vmatprep.subr.bf16.mxu0 0
    %68 = vmatpush1.bf16.msra.mxu0 0
    %69 = vmatprep.subr.bf16.mxu0 0
    %70 = vmatpush1.bf16.msra.mxu0 0
    %71 = vmatprep.subr.bf16.mxu0 0
    %72 = vmatpush1.bf16.msra.mxu0 0
    %73 = vmatprep.subr.bf16.mxu0 0
    %74 = vmatpush1.bf16.msra.mxu0 0
    %75 = vmatprep.subr.bf16.mxu0 0
    %76 = vmatpush1.bf16.msra.mxu0 0
    %77 = vmatprep.subr.bf16.mxu0 0
    %78 = vmatpush1.bf16.msra.mxu0 0
    %79 = vmatprep.subr.bf16.mxu0 0
    %80 = vmatpush1.bf16.msra.mxu0 0
    %81 = vmatprep.subr.bf16.mxu0 0
    %82 = vmatpush1.bf16.msra.mxu0 0
    %83 = vmatprep.subr.bf16.mxu0 0
    %84 = vmatpush1.bf16.msra.mxu0 0
    %85 = vmatprep.subr.bf16.mxu0 0
    %86 = vmatpush1.bf16.msra.mxu0 0
    %87 = vmatprep.subr.bf16.mxu0 0
    %88 = vmatpush1.bf16.msra.mxu0 0
    %89 = vmatprep.subr.bf16.mxu0 0
    %90 = vmatpush1.bf16.msra.mxu0 0
    %91 = vmatprep.subr.bf16.mxu0 0
    %92 = vmatpush1.bf16.msra.mxu0 0
    %93 = vmatprep.subr.bf16.mxu0 0
    %94 = vmatpush1.bf16.msra.mxu0 0
    %95 = vmatprep.mubr.bf16.mxu0 0
    %96 = vmatmul.mubr.bf16.gmra.mrb[0].mxu0 %v57
    %v97 = vpop.f32.mrb[0].mxu0
    %v98 = vadd.f32 %v53, %v97
    %v99 = vpop.f32.mrb[0].mxu0
    %v100 = vpop.f32.mrb[0].mxu0
    %v101 = vpop.f32.mrb[0].mxu0
    %102 = vdwg.mxu0
    %s103 = scalar_lea.vmem [#allocation4], 16
    %v104 = vld [vmem:[%s103] sm:$0xf]
    %v105 = vpack.c.bf16 %v98, %v98
    %106 = vset.pattern.permute.xlu0 2
    %107 = vperm.xlu0 %106, %v49
    %v108 = vpop.permute.xlu0 %107
    %v111 = vsel %vm55, %v104, 0
    %v114 = vsel %vm59, %v105, 0
    %116 = vmatprep.subr.bf16.mxu0 0
    %117 = vmatpush1.bf16.msra.mxu0 %v114
    %118 = vmatprep.subr.bf16.mxu0 0
    %119 = vmatpush1.bf16.msra.mxu0 0
    %120 = vmatprep.subr.bf16.mxu0 0
    %121 = vmatpush1.bf16.msra.mxu0 0
    %122 = vmatprep.subr.bf16.mxu0 0
    %123 = vmatpush1.bf16.msra.mxu0 0
    %124 = vmatprep.subr.bf16.mxu0 0
    %125 = vmatpush1.bf16.msra.mxu0 0
    %126 = vmatprep.subr.bf16.mxu0 0
    %127 = vmatpush1.bf16.msra.mxu0 0
    %128 = vmatprep.subr.bf16.mxu0 0
    %129 = vmatpush1.bf16.msra.mxu0 0
    %130 = vmatprep.subr.bf16.mxu0 0
    %131 = vmatpush1.bf16.msra.mxu0 0
    %132 = vmatprep.subr.bf16.mxu0 0
    %133 = vmatpush1.bf16.msra.mxu0 0
    %134 = vmatprep.subr.bf16.mxu0 0
    %135 = vmatpush1.bf16.msra.mxu0 0
    %136 = vmatprep.subr.bf16.mxu0 0
    %137 = vmatpush1.bf16.msra.mxu0 0
    %138 = vmatprep.subr.bf16.mxu0 0
    %139 = vmatpush1.bf16.msra.mxu0 0
    %140 = vmatprep.subr.bf16.mxu0 0
    %141 = vmatpush1.bf16.msra.mxu0 0
    %142 = vmatprep.subr.bf16.mxu0 0
    %143 = vmatpush1.bf16.msra.mxu0 0
    %144 = vmatprep.subr.bf16.mxu0 0
    %145 = vmatpush1.bf16.msra.mxu0 0
    %146 = vmatprep.subr.bf16.mxu0 0
    %147 = vmatpush1.bf16.msra.mxu0 0
    %148 = vmatprep.mubr.bf16.mxu0 0
    %149 = vmatmul.mubr.bf16.gmra.mrb[0].mxu0 %v111
    %v150 = vpop.f32.mrb[0].mxu0
    %v151 = vadd.f32 %v108, %v150
    %v152 = vpop.f32.mrb[0].mxu0
    %v153 = vpop.f32.mrb[0].mxu0
    %v154 = vpop.f32.mrb[0].mxu0
    %155 = vdwg.mxu0
    %v156 = vpack.c.bf16 %v151, %v151
    %v157 = vld [vmem:[#allocation2] sm:$0xf]
    %v158 = vld [vmem:[#allocation2 + $0x4] sm:$0xf]
    %v159 = vld [vmem:[#allocation2 + $0x8] sm:$0xf]
    %v160 = vld [vmem:[#allocation2 + $0xc] sm:$0xf]
    %v161 = vld [vmem:[#allocation2 + $0x10] sm:$0xf]
    %v162 = vld [vmem:[#allocation2 + $0x14] sm:$0xf]
    %v163 = vld [vmem:[#allocation2 + $0x18] sm:$0xf]
    %v164 = vld [vmem:[#allocation2 + $0x1c] sm:$0xf]
    %v173 = vunpack.c.l.b16 %v157
    %v174 = vunpack.c.l.b16 %v158
    %v175 = vunpack.c.l.b16 %v159
    %v176 = vunpack.c.l.b16 %v160
    %v177 = vunpack.c.l.b16 %v161
    %v178 = vunpack.c.l.b16 %v162
    %v179 = vunpack.c.l.b16 %v163
    %v180 = vunpack.c.l.b16 %v164
    %v181 = vpack.c.b16 %v174, %v173
    %v182 = vpack.c.b16 %v176, %v175
    %v183 = vpack.c.b16 %v178, %v177
    %v184 = vpack.c.b16 %v180, %v179
    %vm189 = vcmask 523264
    %v191 = vsel %vm189, %v156, 0
    %193 = vmatprep.subr.bf16.mxu0 0
    %194 = vmatpush1.bf16.msra.mxu0 %v181
    %195 = vmatprep.subr.bf16.mxu0 0
    %196 = vmatpush1.bf16.msra.mxu0 %v182
    %197 = vmatprep.subr.bf16.mxu0 0
    %198 = vmatpush1.bf16.msra.mxu0 %v183
    %199 = vmatprep.subr.bf16.mxu0 0
    %200 = vmatpush1.bf16.msra.mxu0 %v184
    %201 = vmatprep.subr.bf16.mxu0 0
    %202 = vmatpush1.bf16.msra.mxu0 0
    %203 = vmatprep.subr.bf16.mxu0 0
    %204 = vmatpush1.bf16.msra.mxu0 0
    %205 = vmatprep.subr.bf16.mxu0 0
    %206 = vmatpush1.bf16.msra.mxu0 0
    %207 = vmatprep.subr.bf16.mxu0 0
    %208 = vmatpush1.bf16.msra.mxu0 0
    %209 = vmatprep.subr.bf16.mxu0 0
    %210 = vmatpush1.bf16.msra.mxu0 0
    %211 = vmatprep.subr.bf16.mxu0 0
    %212 = vmatpush1.bf16.msra.mxu0 0
    %213 = vmatprep.subr.bf16.mxu0 0
    %214 = vmatpush1.bf16.msra.mxu0 0
    %215 = vmatprep.subr.bf16.mxu0 0
    %216 = vmatpush1.bf16.msra.mxu0 0
    %217 = vmatprep.subr.bf16.mxu0 0
    %218 = vmatpush1.bf16.msra.mxu0 0
    %219 = vmatprep.subr.bf16.mxu0 0
    %220 = vmatpush1.bf16.msra.mxu0 0
    %221 = vmatprep.subr.bf16.mxu0 0
    %222 = vmatpush1.bf16.msra.mxu0 0
    %223 = vmatprep.subr.bf16.mxu0 0
    %224 = vmatpush1.bf16.msra.mxu0 0
    %225 = vmatprep.mubr.bf16.mxu0 0
    %226 = vmatmul.mubr.bf16.gmra.mrb[0].mxu0 %v191
    %v227 = vpop.f32.mrb[0].mxu0
    %v228 = vadd.f32 %v98, %v227
    %v229 = vpop.f32.mrb[0].mxu0
    %v230 = vpop.f32.mrb[0].mxu0
    %v231 = vpop.f32.mrb[0].mxu0
    %232 = vdwg.mxu0
    %v233 = vrot.slane %v228, 4
    %v234 = vadd.f32 %v228, %v233
    %v235 = vrot.slane %v234, 2
    %v236 = vadd.f32 %v234, %v235
    %v237 = vrot.slane %v236, 1
    %v238 = vadd.f32 %v236, %v237
    %v239 = vrcp.pop 8.0
    %v240 = vmul.f32 %v238, %v239
    %v241 = vmul.f32 %v228, %v228
    %v242 = vrot.slane %v241, 4
    %v243 = vadd.f32 %v241, %v242
    %v244 = vrot.slane %v243, 2
    %v245 = vadd.f32 %v243, %v244
    %v246 = vrot.slane %v245, 1
    %v247 = vadd.f32 %v245, %v246
    %v248 = vmul.f32 %v247, %v239
    %v249 = vmul.f32 %v240, %v240
    %v250 = vsub.f32 %v248, %v249
    %v251 = vsub.f32 %v228, %v240
    %v252 = vadd.f32 %v250, 1e-05
    %v253 = vrsqrt.pop %v252
    %v254 = vmul.f32 %v251, %v253
    %255 = vset.pattern.permute.xlu0 3
    %256 = vperm.xlu0 %255, %v49
    %v257 = vpop.permute.xlu0 %256
    %v259 = vmul.f32 %v254, %v257
    %260 = vset.pattern.permute.xlu0 4
    %261 = vperm.xlu0 %260, %v49
    %v262 = vpop.permute.xlu0 %261
    %v264 = vadd.f32 %v259, %v262
    %s265 = scalar_lea.vmem [#allocation4], 24
    %v266 = vld [vmem:[%s265] sm:$0xf]
    %v267 = vld [vmem:[%s265 + $0x4] sm:$0xf]
    %v268 = vpack.c.bf16 %v264, %v264
    %v269 = vld [vmem:[%s3] sm:$0xff]
    %v270 = vld [vmem:[%s3 + $0x8] sm:$0xff]
    %272 = vset.pattern.permute.xlu0 5
    %273 = vperm.xlu0 %272, %v269
    %v274 = vpop.permute.xlu0 %273
    %277 = vset.pattern.permute.xlu0 5
    %278 = vperm.xlu0 %277, %v270
    %v279 = vpop.permute.xlu0 %278
    %v283 = vunpack.c.l.b16 %v266
    %v284 = vunpack.c.l.b16 %v267
    %v285 = vpack.c.b16 %v284, %v283
    %v287 = vsel %vm55, %v285, 0
    %v290 = vsel %vm59, %v268, 0
    %292 = vmatprep.subr.bf16.mxu0 0
    %293 = vmatpush1.bf16.msra.mxu0 %v290
    %294 = vmatprep.subr.bf16.mxu0 0
    %295 = vmatpush1.bf16.msra.mxu0 0
    %296 = vmatprep.subr.bf16.mxu0 0
    %297 = vmatpush1.bf16.msra.mxu0 0
    %298 = vmatprep.subr.bf16.mxu0 0
    %299 = vmatpush1.bf16.msra.mxu0 0
    %300 = vmatprep.subr.bf16.mxu0 0
    %301 = vmatpush1.bf16.msra.mxu0 0
    %302 = vmatprep.subr.bf16.mxu0 0
    %303 = vmatpush1.bf16.msra.mxu0 0
    %304 = vmatprep.subr.bf16.mxu0 0
    %305 = vmatpush1.bf16.msra.mxu0 0
    %306 = vmatprep.subr.bf16.mxu0 0
    %307 = vmatpush1.bf16.msra.mxu0 0
    %308 = vmatprep.subr.bf16.mxu0 0
    %309 = vmatpush1.bf16.msra.mxu0 0
    %310 = vmatprep.subr.bf16.mxu0 0
    %311 = vmatpush1.bf16.msra.mxu0 0
    %312 = vmatprep.subr.bf16.mxu0 0
    %313 = vmatpush1.bf16.msra.mxu0 0
    %314 = vmatprep.subr.bf16.mxu0 0
    %315 = vmatpush1.bf16.msra.mxu0 0
    %316 = vmatprep.subr.bf16.mxu0 0
    %317 = vmatpush1.bf16.msra.mxu0 0
    %318 = vmatprep.subr.bf16.mxu0 0
    %319 = vmatpush1.bf16.msra.mxu0 0
    %320 = vmatprep.subr.bf16.mxu0 0
    %321 = vmatpush1.bf16.msra.mxu0 0
    %322 = vmatprep.subr.bf16.mxu0 0
    %323 = vmatpush1.bf16.msra.mxu0 0
    %324 = vmatprep.mubr.bf16.mxu0 0
    %325 = vmatmul.mubr.bf16.gmra.mrb[0].mxu0 %v287
    %v326 = vpop.f32.mrb[0].mxu0
    %v327 = vadd.f32 %v274, %v326
    %v328 = vpop.f32.mrb[0].mxu0
    %v329 = vpop.f32.mrb[0].mxu0
    %v330 = vadd.f32 %v279, %v329
    %v331 = vpop.f32.mrb[0].mxu0
    %332 = vdwg.mxu0
    %v333 = vmax.f32 %v327, 0.0
    %v334 = vmax.f32 %v330, 0.0
    %s335 = scalar_lea.vmem [#allocation4], 32
    %v336 = vld [vmem:[%s335] sm:$0xf]
    %v337 = vpack.c.bf16 %v334, %v333
    %338 = vset.pattern.permute.xlu0 6
    %339 = vperm.xlu0 %338, %v49
    %v340 = vpop.permute.xlu0 %339
    %vm342 = vcmask 130048
    %v344 = vsel %vm342, %v336, 0
    %346 = vmatprep.subr.bf16.mxu0 0
    %347 = vmatpush1.bf16.msra.mxu0 %v337
    %348 = vmatprep.subr.bf16.mxu0 0
    %349 = vmatpush1.bf16.msra.mxu0 0
    %350 = vmatprep.subr.bf16.mxu0 0
    %351 = vmatpush1.bf16.msra.mxu0 0
    %352 = vmatprep.subr.bf16.mxu0 0
    %353 = vmatpush1.bf16.msra.mxu0 0
    %354 = vmatprep.subr.bf16.mxu0 0
    %355 = vmatpush1.bf16.msra.mxu0 0
    %356 = vmatprep.subr.bf16.mxu0 0
    %357 = vmatpush1.bf16.msra.mxu0 0
    %358 = vmatprep.subr.bf16.mxu0 0
    %359 = vmatpush1.bf16.msra.mxu0 0
    %360 = vmatprep.subr.bf16.mxu0 0
    %361 = vmatpush1.bf16.msra.mxu0 0
    %362 = vmatprep.subr.bf16.mxu0 0
    %363 = vmatpush1.bf16.msra.mxu0 0
    %364 = vmatprep.subr.bf16.mxu0 0
    %365 = vmatpush1.bf16.msra.mxu0 0
    %366 = vmatprep.subr.bf16.mxu0 0
    %367 = vmatpush1.bf16.msra.mxu0 0
    %368 = vmatprep.subr.bf16.mxu0 0
    %369 = vmatpush1.bf16.msra.mxu0 0
    %370 = vmatprep.subr.bf16.mxu0 0
    %371 = vmatpush1.bf16.msra.mxu0 0
    %372 = vmatprep.subr.bf16.mxu0 0
    %373 = vmatpush1.bf16.msra.mxu0 0
    %374 = vmatprep.subr.bf16.mxu0 0
    %375 = vmatpush1.bf16.msra.mxu0 0
    %376 = vmatprep.subr.bf16.mxu0 0
    %377 = vmatpush1.bf16.msra.mxu0 0
    %378 = vmatprep.mubr.bf16.mxu0 0
    %379 = vmatmul.mubr.bf16.gmra.mrb[0].mxu0 %v344
    %v380 = vpop.f32.mrb[0].mxu0
    %v381 = vadd.f32 %v340, %v380
    %v382 = vpop.f32.mrb[0].mxu0
    %v383 = vpop.f32.mrb[0].mxu0
    %v384 = vpop.f32.mrb[0].mxu0
    %385 = vdwg.mxu0
    %v386 = vadd.f32 %v381, %v264
    %v387 = vrot.slane %v386, 4
    %v388 = vadd.f32 %v386, %v387
    %v389 = vrot.slane %v388, 2
    %v390 = vadd.f32 %v388, %v389
    %v391 = vrot.slane %v390, 1
    %v392 = vadd.f32 %v390, %v391
    %v393 = vmul.f32 %v392, %v239
    %v394 = vmul.f32 %v386, %v386
    %v395 = vrot.slane %v394, 4
    %v396 = vadd.f32 %v394, %v395
    %v397 = vrot.slane %v396, 2
    %v398 = vadd.f32 %v396, %v397
    %v399 = vrot.slane %v398, 1
    %v400 = vadd.f32 %v398, %v399
    %v401 = vmul.f32 %v400, %v239
    %v402 = vmul.f32 %v393, %v393
    %v403 = vsub.f32 %v401, %v402
    %v404 = vsub.f32 %v386, %v393
    %v405 = vadd.f32 %v403, 1e-05
    %v406 = vrsqrt.pop %v405
    %v407 = vmul.f32 %v404, %v406
    %v408 = vmul.f32 %v407, %v257
    %v409 = vadd.f32 %v408, %v262
    %s410 = scalar_lea.vmem [#allocation4], 40
    %v411 = vld [vmem:[%s410] sm:$0xf]
    %v412 = vpack.c.bf16 %v409, %v409
    %413 = vset.pattern.permute.xlu0 7
    %414 = vperm.xlu0 %413, %v49
    %v415 = vpop.permute.xlu0 %414
    %v418 = vsel %vm55, %v411, 0
    %v421 = vsel %vm59, %v412, 0
    %423 = vmatprep.subr.bf16.mxu0 0
    %424 = vmatpush1.bf16.msra.mxu0 %v421
    %425 = vmatprep.subr.bf16.mxu0 0
    %426 = vmatpush1.bf16.msra.mxu0 0
    %427 = vmatprep.subr.bf16.mxu0 0
    %428 = vmatpush1.bf16.msra.mxu0 0
    %429 = vmatprep.subr.bf16.mxu0 0
    %430 = vmatpush1.bf16.msra.mxu0 0
    %431 = vmatprep.subr.bf16.mxu0 0
    %432 = vmatpush1.bf16.msra.mxu0 0
    %433 = vmatprep.subr.bf16.mxu0 0
    %434 = vmatpush1.bf16.msra.mxu0 0
    %435 = vmatprep.subr.bf16.mxu0 0
    %436 = vmatpush1.bf16.msra.mxu0 0
    %437 = vmatprep.subr.bf16.mxu0 0
    %438 = vmatpush1.bf16.msra.mxu0 0
    %439 = vmatprep.subr.bf16.mxu0 0
    %440 = vmatpush1.bf16.msra.mxu0 0
    %441 = vmatprep.subr.bf16.mxu0 0
    %442 = vmatpush1.bf16.msra.mxu0 0
    %443 = vmatprep.subr.bf16.mxu0 0
    %444 = vmatpush1.bf16.msra.mxu0 0
    %445 = vmatprep.subr.bf16.mxu0 0
    %446 = vmatpush1.bf16.msra.mxu0 0
    %447 = vmatprep.subr.bf16.mxu0 0
    %448 = vmatpush1.bf16.msra.mxu0 0
    %449 = vmatprep.subr.bf16.mxu0 0
    %450 = vmatpush1.bf16.msra.mxu0 0
    %451 = vmatprep.subr.bf16.mxu0 0
    %452 = vmatpush1.bf16.msra.mxu0 0
    %453 = vmatprep.subr.bf16.mxu0 0
    %454 = vmatpush1.bf16.msra.mxu0 0
    %455 = vmatprep.mubr.bf16.mxu0 0
    %456 = vmatmul.mubr.bf16.gmra.mrb[0].mxu0 %v418
    %v457 = vpop.f32.mrb[0].mxu0
    %v458 = vadd.f32 %v415, %v457
    %v459 = vpop.f32.mrb[0].mxu0
    %v460 = vpop.f32.mrb[0].mxu0
    %v461 = vpop.f32.mrb[0].mxu0
    %462 = vdwg.mxu0
    %v463 = vpack.c.bf16 %v458, %v458
    %s464 = scalar_lea.vmem [#allocation2], 32
    %v465 = vld [vmem:[%s464] sm:$0xf]
    %v466 = vld [vmem:[%s464 + $0x4] sm:$0xf]
    %v467 = vld [vmem:[%s464 + $0x8] sm:$0xf]
    %v468 = vld [vmem:[%s464 + $0xc] sm:$0xf]
    %v469 = vld [vmem:[%s464 + $0x10] sm:$0xf]
    %v470 = vld [vmem:[%s464 + $0x14] sm:$0xf]
    %v471 = vld [vmem:[%s464 + $0x18] sm:$0xf]
    %v472 = vld [vmem:[%s464 + $0x1c] sm:$0xf]
    %v481 = vunpack.c.l.b16 %v465
    %v482 = vunpack.c.l.b16 %v466
    %v483 = vunpack.c.l.b16 %v467
    %v484 = vunpack.c.l.b16 %v468
    %v485 = vunpack.c.l.b16 %v469
    %v486 = vunpack.c.l.b16 %v470
    %v487 = vunpack.c.l.b16 %v471
    %v488 = vunpack.c.l.b16 %v472
    %v489 = vpack.c.b16 %v482, %v481
    %v490 = vpack.c.b16 %v484, %v483
    %v491 = vpack.c.b16 %v486, %v485
    %v492 = vpack.c.b16 %v488, %v487
    %v498 = vsel %vm189, %v463, 0
    %500 = vmatprep.subr.bf16.mxu0 0
    %501 = vmatpush1.bf16.msra.mxu0 %v489
    %502 = vmatprep.subr.bf16.mxu0 0
    %503 = vmatpush1.bf16.msra.mxu0 %v490
    %504 = vmatprep.subr.bf16.mxu0 0
    %505 = vmatpush1.bf16.msra.mxu0 %v491
    %506 = vmatprep.subr.bf16.mxu0 0
    %507 = vmatpush1.bf16.msra.mxu0 %v492
    %508 = vmatprep.subr.bf16.mxu0 0
    %509 = vmatpush1.bf16.msra.mxu0 0
    %510 = vmatprep.subr.bf16.mxu0 0
    %511 = vmatpush1.bf16.msra.mxu0 0
    %512 = vmatprep.subr.bf16.mxu0 0
    %513 = vmatpush1.bf16.msra.mxu0 0
    %514 = vmatprep.subr.bf16.mxu0 0
    %515 = vmatpush1.bf16.msra.mxu0 0
    %516 = vmatprep.subr.bf16.mxu0 0
    %517 = vmatpush1.bf16.msra.mxu0 0
    %518 = vmatprep.subr.bf16.mxu0 0
    %519 = vmatpush1.bf16.msra.mxu0 0
    %520 = vmatprep.subr.bf16.mxu0 0
    %521 = vmatpush1.bf16.msra.mxu0 0
    %522 = vmatprep.subr.bf16.mxu0 0
    %523 = vmatpush1.bf16.msra.mxu0 0
    %524 = vmatprep.subr.bf16.mxu0 0
    %525 = vmatpush1.bf16.msra.mxu0 0
    %526 = vmatprep.subr.bf16.mxu0 0
    %527 = vmatpush1.bf16.msra.mxu0 0
    %528 = vmatprep.subr.bf16.mxu0 0
    %529 = vmatpush1.bf16.msra.mxu0 0
    %530 = vmatprep.subr.bf16.mxu0 0
    %531 = vmatpush1.bf16.msra.mxu0 0
    %532 = vmatprep.mubr.bf16.mxu0 0
    %533 = vmatmul.mubr.bf16.gmra.mrb[0].mxu0 %v498
    %v534 = vpop.f32.mrb[0].mxu0
    %v535 = vadd.f32 %v409, %v534
    %v536 = vpop.f32.mrb[0].mxu0
    %v537 = vpop.f32.mrb[0].mxu0
    %v538 = vpop.f32.mrb[0].mxu0
    %539 = vdwg.mxu0
    %v540 = vrot.slane %v535, 4
    %v541 = vadd.f32 %v535, %v540
    %v542 = vrot.slane %v541, 2
    %v543 = vadd.f32 %v541, %v542
    %v544 = vrot.slane %v543, 1
    %v545 = vadd.f32 %v543, %v544
    %v546 = vmul.f32 %v545, %v239
    %v547 = vmul.f32 %v535, %v535
    %v548 = vrot.slane %v547, 4
    %v549 = vadd.f32 %v547, %v548
    %v550 = vrot.slane %v549, 2
    %v551 = vadd.f32 %v549, %v550
    %v552 = vrot.slane %v551, 1
    %v553 = vadd.f32 %v551, %v552
    %v554 = vmul.f32 %v553, %v239
    %v555 = vmul.f32 %v546, %v546
    %v556 = vsub.f32 %v554, %v555
    %v557 = vsub.f32 %v535, %v546
    %v558 = vadd.f32 %v556, 1e-05
    %v559 = vrsqrt.pop %v558
    %v560 = vmul.f32 %v557, %v559
    %561 = vset.pattern.permute.xlu0 8
    %562 = vperm.xlu0 %561, %v49
    %v563 = vpop.permute.xlu0 %562
    %v565 = vmul.f32 %v560, %v563
    %566 = vset.pattern.permute.xlu0 9
    %567 = vperm.xlu0 %566, %v49
    %v568 = vpop.permute.xlu0 %567
    %v570 = vadd.f32 %v565, %v568
    %s571 = scalar_lea.vmem [#allocation4], 48
    %v572 = vld [vmem:[%s571] sm:$0xf]
    %v573 = vld [vmem:[%s571 + $0x4] sm:$0xf]
    %v574 = vpack.c.bf16 %v570, %v570
    %575 = vset.pattern.permute.xlu0 10
    %576 = vperm.xlu0 %575, %v269
    %v577 = vpop.permute.xlu0 %576
    %579 = vset.pattern.permute.xlu0 10
    %580 = vperm.xlu0 %579, %v270
    %v581 = vpop.permute.xlu0 %580
    %v585 = vunpack.c.l.b16 %v572
    %v586 = vunpack.c.l.b16 %v573
    %v587 = vpack.c.b16 %v586, %v585
    %v589 = vsel %vm55, %v587, 0
    %v592 = vsel %vm59, %v574, 0
    %594 = vmatprep.subr.bf16.mxu0 0
    %595 = vmatpush1.bf16.msra.mxu0 %v592
    %596 = vmatprep.subr.bf16.mxu0 0
    %597 = vmatpush1.bf16.msra.mxu0 0
    %598 = vmatprep.subr.bf16.mxu0 0
    %599 = vmatpush1.bf16.msra.mxu0 0
    %600 = vmatprep.subr.bf16.mxu0 0
    %601 = vmatpush1.bf16.msra.mxu0 0
    %602 = vmatprep.subr.bf16.mxu0 0
    %603 = vmatpush1.bf16.msra.mxu0 0
    %604 = vmatprep.subr.bf16.mxu0 0
    %605 = vmatpush1.bf16.msra.mxu0 0
    %606 = vmatprep.subr.bf16.mxu0 0
    %607 = vmatpush1.bf16.msra.mxu0 0
    %608 = vmatprep.subr.bf16.mxu0 0
    %609 = vmatpush1.bf16.msra.mxu0 0
    %610 = vmatprep.subr.bf16.mxu0 0
    %611 = vmatpush1.bf16.msra.mxu0 0
    %612 = vmatprep.subr.bf16.mxu0 0
    %613 = vmatpush1.bf16.msra.mxu0 0
    %614 = vmatprep.subr.bf16.mxu0 0
    %615 = vmatpush1.bf16.msra.mxu0 0
    %616 = vmatprep.subr.bf16.mxu0 0
    %617 = vmatpush1.bf16.msra.mxu0 0
    %618 = vmatprep.subr.bf16.mxu0 0
    %619 = vmatpush1.bf16.msra.mxu0 0
    %620 = vmatprep.subr.bf16.mxu0 0
    %621 = vmatpush1.bf16.msra.mxu0 0
    %622 = vmatprep.subr.bf16.mxu0 0
    %623 = vmatpush1.bf16.msra.mxu0 0
    %624 = vmatprep.subr.bf16.mxu0 0
    %625 = vmatpush1.bf16.msra.mxu0 0
    %626 = vmatprep.mubr.bf16.mxu0 0
    %627 = vmatmul.mubr.bf16.gmra.mrb[0].mxu0 %v589
    %v628 = vpop.f32.mrb[0].mxu0
    %v629 = vadd.f32 %v577, %v628
    %v630 = vpop.f32.mrb[0].mxu0
    %v631 = vpop.f32.mrb[0].mxu0
    %v632 = vadd.f32 %v581, %v631
    %v633 = vpop.f32.mrb[0].mxu0
    %634 = vdwg.mxu0
    %v635 = vmax.f32 %v629, 0.0
    %v636 = vmax.f32 %v632, 0.0
    %s637 = scalar_lea.vmem [#allocation4], 56
    %v638 = vld [vmem:[%s637] sm:$0xf]
    %v639 = vpack.c.bf16 %v636, %v635
    %640 = vset.pattern.permute.xlu0 11
    %641 = vperm.xlu0 %640, %v49
    %v642 = vpop.permute.xlu0 %641
    %v645 = vsel %vm342, %v638, 0
    %647 = vmatprep.subr.bf16.mxu0 0
    %648 = vmatpush1.bf16.msra.mxu0 %v639
    %649 = vmatprep.subr.bf16.mxu0 0
    %650 = vmatpush1.bf16.msra.mxu0 0
    %651 = vmatprep.subr.bf16.mxu0 0
    %652 = vmatpush1.bf16.msra.mxu0 0
    %653 = vmatprep.subr.bf16.mxu0 0
    %654 = vmatpush1.bf16.msra.mxu0 0
    %655 = vmatprep.subr.bf16.mxu0 0
    %656 = vmatpush1.bf16.msra.mxu0 0
    %657 = vmatprep.subr.bf16.mxu0 0
    %658 = vmatpush1.bf16.msra.mxu0 0
    %659 = vmatprep.subr.bf16.mxu0 0
    %660 = vmatpush1.bf16.msra.mxu0 0
    %661 = vmatprep.subr.bf16.mxu0 0
    %662 = vmatpush1.bf16.msra.mxu0 0
    %663 = vmatprep.subr.bf16.mxu0 0
    %664 = vmatpush1.bf16.msra.mxu0 0
    %665 = vmatprep.subr.bf16.mxu0 0
    %666 = vmatpush1.bf16.msra.mxu0 0
    %667 = vmatprep.subr.bf16.mxu0 0
    %668 = vmatpush1.bf16.msra.mxu0 0
    %669 = vmatprep.subr.bf16.mxu0 0
    %670 = vmatpush1.bf16.msra.mxu0 0
    %671 = vmatprep.subr.bf16.mxu0 0
    %672 = vmatpush1.bf16.msra.mxu0 0
    %673 = vmatprep.subr.bf16.mxu0 0
    %674 = vmatpush1.bf16.msra.mxu0 0
    %675 = vmatprep.subr.bf16.mxu0 0
    %676 = vmatpush1.bf16.msra.mxu0 0
    %677 = vmatprep.subr.bf16.mxu0 0
    %678 = vmatpush1.bf16.msra.mxu0 0
    %679 = vmatprep.mubr.bf16.mxu0 0
    %680 = vmatmul.mubr.bf16.gmra.mrb[0].mxu0 %v645
    %v681 = vpop.f32.mrb[0].mxu0
    %v682 = vadd.f32 %v642, %v681
    %v683 = vpop.f32.mrb[0].mxu0
    %v684 = vpop.f32.mrb[0].mxu0
    %v685 = vpop.f32.mrb[0].mxu0
    %686 = vdwg.mxu0
    %v687 = vadd.f32 %v682, %v570
    %v688 = vrot.slane %v687, 4
    %v689 = vadd.f32 %v687, %v688
    %v690 = vrot.slane %v689, 2
    %v691 = vadd.f32 %v689, %v690
    %v692 = vrot.slane %v691, 1
    %v693 = vadd.f32 %v691, %v692
    %v694 = vmul.f32 %v693, %v239
    %v695 = vmul.f32 %v687, %v687
    %v696 = vrot.slane %v695, 4
    %v697 = vadd.f32 %v695, %v696
    %v698 = vrot.slane %v697, 2
    %v699 = vadd.f32 %v697, %v698
    %v700 = vrot.slane %v699, 1
    %v701 = vadd.f32 %v699, %v700
    %v702 = vmul.f32 %v701, %v239
    %v703 = vmul.f32 %v694, %v694
    %v704 = vsub.f32 %v702, %v703
    %v705 = vsub.f32 %v687, %v694
    %v706 = vadd.f32 %v704, 1e-05
    %v707 = vrsqrt.pop %v706
    %v708 = vmul.f32 %v705, %v707
    %v709 = vmul.f32 %v708, %v563
    %v710 = vadd.f32 %v709, %v568
    %s711 = scalar_lea.vmem [#allocation4], 8
    %v712 = vld [vmem:[%s711] sm:$0xf]
    %v713 = vpack.c.bf16 %v710, %v710
    %714 = vset.pattern.permute.xlu0 1
    %715 = vperm.xlu0 %714, %v49
    %v716 = vpop.permute.xlu0 %715
    %v719 = vsel %vm55, %v712, 0
    %v722 = vsel %vm59, %v713, 0
    %724 = vmatprep.subr.bf16.mxu0 0
    %725 = vmatpush1.bf16.msra.mxu0 %v722
    %726 = vmatprep.subr.bf16.mxu0 0
    %727 = vmatpush1.bf16.msra.mxu0 0
    %728 = vmatprep.subr.bf16.mxu0 0
    %729 = vmatpush1.bf16.msra.mxu0 0
    %730 = vmatprep.subr.bf16.mxu0 0
    %731 = vmatpush1.bf16.msra.mxu0 0
    %732 = vmatprep.subr.bf16.mxu0 0
    %733 = vmatpush1.bf16.msra.mxu0 0
    %734 = vmatprep.subr.bf16.mxu0 0
    %735 = vmatpush1.bf16.msra.mxu0 0
    %736 = vmatprep.subr.bf16.mxu0 0
    %737 = vmatpush1.bf16.msra.mxu0 0
    %738 = vmatprep.subr.bf16.mxu0 0
    %739 = vmatpush1.bf16.msra.mxu0 0
    %740 = vmatprep.subr.bf16.mxu0 0
    %741 = vmatpush1.bf16.msra.mxu0 0
    %742 = vmatprep.subr.bf16.mxu0 0
    %743 = vmatpush1.bf16.msra.mxu0 0
    %744 = vmatprep.subr.bf16.mxu0 0
    %745 = vmatpush1.bf16.msra.mxu0 0
    %746 = vmatprep.subr.bf16.mxu0 0
    %747 = vmatpush1.bf16.msra.mxu0 0
    %748 = vmatprep.subr.bf16.mxu0 0
    %749 = vmatpush1.bf16.msra.mxu0 0
    %750 = vmatprep.subr.bf16.mxu0 0
    %751 = vmatpush1.bf16.msra.mxu0 0
    %752 = vmatprep.subr.bf16.mxu0 0
    %753 = vmatpush1.bf16.msra.mxu0 0
    %754 = vmatprep.subr.bf16.mxu0 0
    %755 = vmatpush1.bf16.msra.mxu0 0
    %756 = vmatprep.mubr.bf16.mxu0 0
    %757 = vmatmul.mubr.bf16.gmra.mrb[0].mxu0 %v719
    %v758 = vpop.f32.mrb[0].mxu0
    %v759 = vadd.f32 %v716, %v758
    %v760 = vpop.f32.mrb[0].mxu0
    %v761 = vpop.f32.mrb[0].mxu0
    %v762 = vpop.f32.mrb[0].mxu0
    %763 = vdwg.mxu0
    %764 = vst [vmem:[%s4] sm:$0xff] %v759
    // Predicated region
    $region26: #{utransformer_forward.1} parent=1 // pred_check
      _
    $region27: #{utransformer_forward.1} parent=1 // pred_check_branch
      %766 = sbr.rel (0) target = $region29
    $region28: #{utransformer_forward.1} parent=1 // pred_region
      _
    $region29: #{utransformer_forward.1} parent=1 // pred_fallthru
      _
    // Predicated region
    $region30: #{utransformer_forward.1} parent=1 // pred_check
      _
    $region31: #{utransformer_forward.1} parent=1 // pred_check_branch
      %768 = sbr.rel (0) target = $region33
    $region32: #{utransformer_forward.1} parent=1 // pred_region
      _
    $region33: #{utransformer_forward.1} parent=1 // pred_fallthru
      _
    %769 = vsyncpa [#allocation3], 1
    %770 = vsyncpa [#allocation5], 1

</llo_original>
